<compile_context>
chip_gen: v5e
topology: v5e:2x2
jax: 0.10.0
libtpu: 0.0.40
codegen_flags: <defaults>
</compile_context>

<pallas_src>
import jax
import jax.numpy as jnp
from jax.experimental import pallas as pl
from jax.experimental.pallas import tpu as pltpu

EPS = 1e-6


def _round_up(v, m):
    return ((v + m - 1) // m) * m


def sublayer_connection_kernel(x_ref, w_ref, fb_ref, o_ref):
    x = x_ref[...].astype(jnp.float32)                     # (TM, D)
    d = x.shape[-1]

    # --- LayerNorm (torch x.std() semantics: unbiased, eps added to std) ---
    mean = jnp.mean(x, axis=-1, keepdims=True)             # (TM, 1)
    centered = x - mean
    var_unb = jnp.sum(centered * centered, axis=-1, keepdims=True) * (1.0 / (d - 1))
    std = jnp.sqrt(var_unb)                                 # (TM, 1)
    inv = pl.reciprocal(std + EPS)                          # one rcp per row, hoisted
    normed = centered * inv                                 # a_2/b_2 folded into W/bias

    # --- sublayer: Linear(D -> D) on the MXU, f32 accumulation ---
    y = jnp.dot(normed.astype(w_ref.dtype), w_ref[...],
                preferred_element_type=jnp.float32)
    y = y + fb_ref[...]

    # --- dropout (identity in eval mode) + residual ---
    o_ref[...] = (x + y).astype(o_ref.dtype)


def sublayer_connection(x, a2, b2, w, bias, *, tm=512, weight_dtype=None):
    """x: (B, S, D). a2/b2/bias: (D,). w: (D, D). Returns (B, S, D).

    weight_dtype=jnp.bfloat16 enables the bf16 MXU path (v6e/v7x); default
    None keeps f32 for exact parity with the torch reference.
    """
    B, S, D = x.shape
    N = B * S
    x2 = x.reshape(N, D)

    # Fold a_2 into W rows; fold b_2 @ W + bias into a single fused bias.
    # (a2*(x-m)/s + b2) @ W + bias  ==  ((x-m)/s) @ (diag(a2) @ W) + (b2 @ W + bias)
    w_folded = (a2[:, None] * w).astype(jnp.float32)
    fused_bias = (b2 @ w + bias).reshape(1, D).astype(jnp.float32)
    if weight_dtype is not None:
        w_folded = w_folded.astype(weight_dtype)

    # Row tiling: biggest tile that makes sense; pad rows so the grid divides.
    tm_eff = max(8, _round_up(min(tm, _round_up(N, 8)), 8))
    N_pad = _round_up(N, tm_eff)
    if N_pad != N:
        # Zero rows are safe: centered=0 -> normed=0, padded outputs are dropped.
        x2 = jnp.pad(x2, ((0, N_pad - N), (0, 0)))

    # Explicit scoped-VMEM budget: double-buffered x + out tiles, (default
    # double-buffered) resident W, fused bias, plus headroom.
    xbytes = tm_eff * D * x2.dtype.itemsize
    wbytes = D * D * jnp.dtype(w_folded.dtype).itemsize
    needed = 2 * xbytes + 2 * xbytes + 2 * wbytes + 2 * D * 4 + (4 << 20)
    vmem_limit = int(min(max(needed, 16 << 20), 64 << 20))

    out = pl.pallas_call(
        sublayer_connection_kernel,
        out_shape=jax.ShapeDtypeStruct((N_pad, D), x.dtype),
        grid_spec=pltpu.PrefetchScalarGridSpec(
            num_scalar_prefetch=0,
            grid=(N_pad // tm_eff,),
            in_specs=[
                pl.BlockSpec((tm_eff, D), lambda i: (i, 0)),  # x row tile
                pl.BlockSpec((D, D), lambda i: (0, 0)),       # folded W (resident)
                pl.BlockSpec((1, D), lambda i: (0, 0)),       # fused bias
            ],
            out_specs=pl.BlockSpec((tm_eff, D), lambda i: (i, 0)),
        ),
        compiler_params=pltpu.CompilerParams(
            dimension_semantics=("parallel",),
            vmem_limit_bytes=vmem_limit,
        ),
    )(x2, w_folded, fused_bias)

    if N_pad != N:
        out = out[:N]
    return out.reshape(B, S, D)


def reference(x, a2, b2, w, bias):
    """Pure-JAX reference replicating the torch module in eval mode."""
    d = x.shape[-1]
    mean = jnp.mean(x, axis=-1, keepdims=True)
    centered = x - mean
    std = jnp.sqrt(jnp.sum(centered * centered, axis=-1, keepdims=True) / (d - 1))
    norm = a2 * centered / (std + EPS) + b2
    y = norm @ w + bias
    return x + y


if __name__ == "__main__":
    key = jax.random.PRNGKey(0)
    kx, kw, kb, ka, kb2, kx2 = jax.random.split(key, 6)

    D = 128
    # Non-trivial LayerNorm params to exercise the a_2/b_2 folding.
    a2 = 1.0 + 0.1 * jax.random.normal(ka, (D,), dtype=jnp.float32)
    b2 = 0.05 * jax.random.normal(kb2, (D,), dtype=jnp.float32)
    # Deterministic sublayer (Linear D->D) params.
    w = jax.random.normal(kw, (D, D), dtype=jnp.float32) * 0.02
    bias = jax.random.normal(kb, (D,), dtype=jnp.float32) * 0.01

    # Small shape (single tile).
    B, S = 2, 8
    x = jax.random.normal(kx, (B, S, D), dtype=jnp.float32)
    out = jax.block_until_ready(sublayer_connection(x, a2, b2, w, bias))
    ref = reference(x, a2, b2, w, bias)
    assert out.shape == (B, S, D)
    assert jnp.allclose(out, ref, atol=1e-4, rtol=1e-4), "mismatch (small shape)"

    # Larger, non-divisible shape: exercises padding + multi-step grid.
    B2, S2 = 4, 197
    xb = jax.random.normal(kx2, (B2, S2, D), dtype=jnp.float32)
    out_b = jax.block_until_ready(sublayer_connection(xb, a2, b2, w, bias))
    ref_b = reference(xb, a2, b2, w, bias)
    assert out_b.shape == (B2, S2, D)
    assert jnp.allclose(out_b, ref_b, atol=1e-4, rtol=1e-4), "mismatch (tiled shape)"

    # bf16-weight MXU path (v6e/v7x throughput option), looser tolerance.
    out_bf = jax.block_until_ready(
        sublayer_connection(xb, a2, b2, w, bias, weight_dtype=jnp.bfloat16))
    assert jnp.allclose(out_bf, ref_b, atol=3e-2, rtol=3e-2), "mismatch (bf16 path)"

    print("KERNEL_OK")
</pallas_src>

<mosaic_0001>
module attributes {stable_mosaic.version = 11 : i64} {
  func.func @sublayer_connection_kernel(%arg0: i32, %arg1: memref<16x128xf32, #tpu.memory_space<vmem>>, %arg2: memref<128x128xf32, #tpu.memory_space<vmem>>, %arg3: memref<1x128xf32, #tpu.memory_space<vmem>>, %arg4: memref<16x128xf32, #tpu.memory_space<vmem>>) attributes {dimension_semantics = [#tpu.dimension_semantics<parallel>], iteration_bounds = array<i64: 1>, scalar_prefetch = 0 : i64, scratch_operands = 0 : i64, tpu.core_type = #tpu.core_type<tc>, window_params = [{transform_indices = @transform_0, window_bounds = array<i64: 16, 128>}, {pipeline_mode = #tpu.pipeline_mode<synchronous>, transform_indices = @transform_1, window_bounds = array<i64: 128, 128>}, {pipeline_mode = #tpu.pipeline_mode<synchronous>, transform_indices = @transform_2, window_bounds = array<i64: 1, 128>}, {transform_indices = @transform_3, window_bounds = array<i64: 16, 128>}]} {
    %c0 = arith.constant 0 : index
    %c0_0 = arith.constant 0 : index
    %0 = vector.load %arg1[%c0, %c0_0] : memref<16x128xf32, #tpu.memory_space<vmem>>, vector<16x128xf32>
    %cst = arith.constant dense<0.000000e+00> : vector<16xf32>
    %1 = vector.multi_reduction <add>, %0, %cst [1] : vector<16x128xf32> to vector<16xf32>
    %2 = vector.shape_cast %1 : vector<16xf32> to vector<16x1xf32>
    %cst_1 = arith.constant 1.280000e+02 : f32
    %3 = vector.broadcast %cst_1 : f32 to vector<16x1xf32>
    %4 = arith.divf %2, %3 : vector<16x1xf32>
    %5 = vector.broadcast %4 : vector<16x1xf32> to vector<16x128xf32>
    %6 = arith.subf %0, %5 : vector<16x128xf32>
    %7 = arith.mulf %6, %6 : vector<16x128xf32>
    %cst_2 = arith.constant dense<0.000000e+00> : vector<16xf32>
    %8 = vector.multi_reduction <add>, %7, %cst_2 [1] : vector<16x128xf32> to vector<16xf32>
    %9 = vector.shape_cast %8 : vector<16xf32> to vector<16x1xf32>
    %cst_3 = arith.constant 0.00787401571 : f32
    %10 = vector.broadcast %cst_3 : f32 to vector<16x1xf32>
    %11 = arith.mulf %9, %10 : vector<16x1xf32>
    %12 = math.sqrt %11 : vector<16x1xf32>
    %cst_4 = arith.constant 9.99999997E-7 : f32
    %13 = vector.broadcast %cst_4 : f32 to vector<16x1xf32>
    %14 = arith.addf %12, %13 : vector<16x1xf32>
    %15 = tpu.reciprocal %14 : vector<16x1xf32> -> vector<16x1xf32>
    %16 = vector.broadcast %15 : vector<16x1xf32> to vector<16x128xf32>
    %17 = arith.mulf %6, %16 : vector<16x128xf32>
    %c0_5 = arith.constant 0 : index
    %c0_6 = arith.constant 0 : index
    %18 = vector.load %arg2[%c0_5, %c0_6] : memref<128x128xf32, #tpu.memory_space<vmem>>, vector<128x128xf32>
    %cst_7 = arith.constant dense<0.000000e+00> : vector<16x128xf32>
    %19 = tpu.matmul %17, %18, %cst_7 {dimension_numbers = #tpu.dot_dimension_numbers<[1], [0], [0], [1], [0, 0, 1, 1], [], []>} : vector<16x128xf32>, vector<128x128xf32>, vector<16x128xf32> -> vector<16x128xf32>
    %c0_8 = arith.constant 0 : index
    %c0_9 = arith.constant 0 : index
    %20 = vector.load %arg3[%c0_8, %c0_9] : memref<1x128xf32, #tpu.memory_space<vmem>>, vector<1x128xf32>
    %21 = vector.broadcast %20 : vector<1x128xf32> to vector<16x128xf32>
    %22 = arith.addf %19, %21 : vector<16x128xf32>
    %23 = arith.addf %0, %22 : vector<16x128xf32>
    %c0_10 = arith.constant 0 : index
    %c0_11 = arith.constant 0 : index
    %24 = vector.load %arg4[%c0_10, %c0_11] : memref<16x128xf32, #tpu.memory_space<vmem>>, vector<16x128xf32>
    tpu.vector_store %arg4[%c0_10, %c0_11], %23 {strides = array<i32>} : memref<16x128xf32, #tpu.memory_space<vmem>>, vector<16x128xf32>,
    return
  }
  func.func @transform_0(%arg0: i32) -> (i32, i32) {
    %c0_i32 = arith.constant 0 : i32
    %c0_i32_0 = arith.constant 0 : i32
    return %arg0, %c0_i32 : i32, i32
  }
  func.func @transform_1(%arg0: i32) -> (i32, i32) {
    %c0_i32 = arith.constant 0 : i32
    %c0_i32_0 = arith.constant 0 : i32
    %c0_i32_1 = arith.constant 0 : i32
    return %c0_i32, %c0_i32_0 : i32, i32
  }
  func.func @transform_2(%arg0: i32) -> (i32, i32) {
    %c0_i32 = arith.constant 0 : i32
    %c0_i32_0 = arith.constant 0 : i32
    %c0_i32_1 = arith.constant 0 : i32
    return %c0_i32, %c0_i32_0 : i32, i32
  }
  func.func @transform_3(%arg0: i32) -> (i32, i32) {
    %c0_i32 = arith.constant 0 : i32
    %c0_i32_0 = arith.constant 0 : i32
    return %arg0, %c0_i32 : i32, i32
  }
}

</mosaic_0001>

<llo_original>
// kernel: tpu_custom_call.1
$region0: #{tpu_custom_call.1}
  #allocation0 [shape = 'u32[]', space=smem, size = 0x4, offset = 0x4, fixed_abs, tag = 'smem constant byte address 0x4 - core index']
  #allocation1 [shape = 'u32[72,128]{1,0:T(1,128)}', space=vmem, size = 0x9000, scoped, tag = 'internal scratch']
  %s0 = inlined_call_operand.hbm [shape: f32[16,128], index: 0, kind: input, shape index: {}]
  %s1 = inlined_call_operand.hbm [shape: f32[128,128], index: 1, kind: input, shape index: {}]
  %s2 = inlined_call_operand.vmem [shape: f32[1,128], index: 2, kind: input, shape index: {}]
  %s3 = inlined_call_operand.hbm [shape: f32[16,128], index: 3, kind: output, shape index: {}]
  %s4 = sld [smem:[#allocation0]]
  $region30: #{tpu_custom_call.1} parent=0
    _
  %s6 = ssub.s32 1, %s4
  %s7 = scalar_select 0, %s6, %s4
  $region1: #{tpu_custom_call.1} parent=0
    #allocation2 [shape = 'u8[8192]{0}', space=vmem, size = 0x2000, scoped, tag = 'input window, operand 0, single buffered']
    #allocation3 [shape = 's32[1]{0}', space=sflag, size = 0x4, scoped, tag = 'scoped memory for tpu_custom_call.1']
    #allocation4 [shape = 's32[1]{0}', space=sflag, size = 0x4, scoped, tag = 'scoped memory for tpu_custom_call.1']
    #allocation5 [shape = 'u8[65536]{0}', space=vmem, size = 0x10000, scoped, tag = 'input window, operand 1, single buffered']
    #allocation6 [shape = 's32[1]{0}', space=sflag, size = 0x4, scoped, tag = 'scoped memory for tpu_custom_call.1']
    #allocation7 [shape = 'u8[8192]{0}', space=vmem, size = 0x2000, scoped, tag = 'output window, operand 0, single buffered']
    %8 = vsyncpa [#allocation3], 0
    %9 = vsyncpa [#allocation6], 0
    %10 = vsyncpa [#allocation4], 0
    // Predicated region
    $region2: #{tpu_custom_call.1} parent=1 // pred_check
      _
    $region3: #{tpu_custom_call.1} parent=1 // pred_check_branch
      %12 = sbr.rel (0) target = $region5
    $region4: #{tpu_custom_call.1} parent=1 // pred_region
      %14 = vsyncadd [#allocation3], 0
      %s15 = sshll.u32 %s0, 4
      %s16 = int_to_ptr.hbm [resolvable:$true] %s15
      %s17 = sshll.u32 [#allocation2], 4
      %s18 = int_to_ptr.vmem [resolvable:$true] %s17
      %23 = dma.hbm_to_vmem [thread:$0]  %s16, 256, %s18, [#allocation3], 128, 128, 8
    $region5: #{tpu_custom_call.1} parent=1 // pred_fallthru
      _
    // Predicated region
    $region6: #{tpu_custom_call.1} parent=1 // pred_check
      _
    $region7: #{tpu_custom_call.1} parent=1 // pred_check_branch
      %25 = sbr.rel (0) target = $region9
    $region8: #{tpu_custom_call.1} parent=1 // pred_region
      %27 = vsyncadd [#allocation6], 0
      %s28 = sshll.u32 %s1, 4
      %s29 = int_to_ptr.hbm [resolvable:$true] %s28
      %s30 = sshll.u32 [#allocation5], 4
      %s31 = int_to_ptr.vmem [resolvable:$true] %s30
      %36 = dma.hbm_to_vmem [thread:$0]  %s29, 2048, %s31, [#allocation6], 128, 128, 8
    $region9: #{tpu_custom_call.1} parent=1 // pred_fallthru
      _
    // Predicated region
    $region10: #{tpu_custom_call.1} parent=1 // pred_check
      _
    $region11: #{tpu_custom_call.1} parent=1 // pred_check_branch
      %38 = sbr.rel (0) target = $region13
    $region12: #{tpu_custom_call.1} parent=1 // pred_region
      _
    $region13: #{tpu_custom_call.1} parent=1 // pred_fallthru
      _
    // Predicated region
    $region14: #{tpu_custom_call.1} parent=1 // pred_check
      _
    $region15: #{tpu_custom_call.1} parent=1 // pred_check_branch
      %40 = sbr.rel (0) target = $region17
    $region16: #{tpu_custom_call.1} parent=1 // pred_region
      %42 = dma.done [#allocation3], 256
    $region17: #{tpu_custom_call.1} parent=1 // pred_fallthru
      _
    // Predicated region
    $region18: #{tpu_custom_call.1} parent=1 // pred_check
      _
    $region19: #{tpu_custom_call.1} parent=1 // pred_check_branch
      %44 = sbr.rel (0) target = $region21
    $region20: #{tpu_custom_call.1} parent=1 // pred_region
      %46 = dma.done [#allocation6], 2048
    $region21: #{tpu_custom_call.1} parent=1 // pred_fallthru
      _
    %v47 = vld [vmem:[#allocation2] sm:$0xff]
    %v48 = vld [vmem:[#allocation2 + $0x8] sm:$0xff]
    %49 = vadd.xlane.f32.xlu0 %v47
    %v50 = vpop.xlane.xlu0 %49
    %51 = vadd.xlane.f32.xlu0 %v48
    %v52 = vpop.xlane.xlu0 %51
    %v53 = vrcp.pop 128.0
    %v54 = vmul.f32 128.0, %v53
    %v55 = vsub.f32 1.0, %v54
    %v56 = vmul.f32 %v53, %v55
    %v57 = vadd.f32 %v53, %v56
    %vm58 = vweird.f32 %v53
    %v59 = vsel %vm58, %v53, %v57
    %v60 = vmul.f32 %v50, %v59
    %v61 = vmul.f32 %v52, %v59
    %v62 = vsub.f32 %v47, %v60
    %v63 = vsub.f32 %v48, %v61
    %v64 = vmul.f32 %v62, %v62
    %v65 = vmul.f32 %v63, %v63
    %66 = vadd.xlane.f32.xlu0 %v64
    %v67 = vpop.xlane.xlu0 %66
    %68 = vadd.xlane.f32.xlu0 %v65
    %v69 = vpop.xlane.xlu0 %68
    %v70 = vmul.f32 %v67, 0.007874016
    %v71 = vmul.f32 %v69, 0.007874016
    %v72 = vrsqrt.pop %v70
    %v73 = vmul.f32 %v72, %v70
    %v74 = vmul.f32 %v73, %v72
    %v75 = vmul.f32 0.5, %v74
    %v76 = vsub.f32 1.5, %v75
    %v77 = vmul.f32 %v72, %v76
    %v78 = vmul.f32 %v70, %v77
    %vm79 = vcmp.eq.f32.partialorder %v70, inf
    %v80 = vsel %vm79, %v70, %v78
    %vm81 = vcmp.eq.f32.partialorder %v70, 0.0
    %v82 = vand.u32 %v70, 2147483648
    %v83 = vsel %vm81, %v82, %v80
    %v84 = vrsqrt.pop %v71
    %v85 = vmul.f32 %v84, %v71
    %v86 = vmul.f32 %v85, %v84
    %v87 = vmul.f32 0.5, %v86
    %v88 = vsub.f32 1.5, %v87
    %v89 = vmul.f32 %v84, %v88
    %v90 = vmul.f32 %v71, %v89
    %vm91 = vcmp.eq.f32.partialorder %v71, inf
    %v92 = vsel %vm91, %v71, %v90
    %vm93 = vcmp.eq.f32.partialorder %v71, 0.0
    %v94 = vand.u32 %v71, 2147483648
    %v95 = vsel %vm93, %v94, %v92
    %v96 = vadd.f32 %v83, 1e-06
    %v97 = vadd.f32 %v95, 1e-06
    %v98 = vrcp.pop %v96
    %v99 = vmul.f32 %v96, %v98
    %v100 = vsub.f32 1.0, %v99
    %v101 = vmul.f32 %v98, %v100
    %v102 = vadd.f32 %v98, %v101
    %vm103 = vweird.f32 %v96
    %vm104 = vweird.f32 %v98
    %vm105 = vmor %vm103, %vm104
    %v106 = vsel %vm105, %v98, %v102
    %v107 = vand.u32 2147483647, %v96
    %vm108 = vcmp.eq.f32.partialorder %v107, 8.507059e+37
    %v109 = vand.u32 %v96, 2147483648
    %v110 = vor.u32 1.1754944e-38, %v109
    %v111 = vsel %vm108, %v110, %v106
    %v112 = vrcp.pop %v97
    %v113 = vmul.f32 %v97, %v112
    %v114 = vsub.f32 1.0, %v113
    %v115 = vmul.f32 %v112, %v114
    %v116 = vadd.f32 %v112, %v115
    %vm117 = vweird.f32 %v97
    %vm118 = vweird.f32 %v112
    %vm119 = vmor %vm117, %vm118
    %v120 = vsel %vm119, %v112, %v116
    %v121 = vand.u32 2147483647, %v97
    %vm122 = vcmp.eq.f32.partialorder %v121, 8.507059e+37
    %v123 = vand.u32 %v97, 2147483648
    %v124 = vor.u32 1.1754944e-38, %v123
    %v125 = vsel %vm122, %v124, %v120
    %v126 = vmul.f32 %v62, %v111
    %v127 = vmul.f32 %v63, %v125
    %v128 = vld [vmem:[#allocation5] sm:$0xff]
    %v129 = vld [vmem:[#allocation5 + $0x8] sm:$0xff]
    %v130 = vld [vmem:[#allocation5 + $0x10] sm:$0xff]
    %v131 = vld [vmem:[#allocation5 + $0x18] sm:$0xff]
    %v132 = vld [vmem:[#allocation5 + $0x20] sm:$0xff]
    %v133 = vld [vmem:[#allocation5 + $0x28] sm:$0xff]
    %v134 = vld [vmem:[#allocation5 + $0x30] sm:$0xff]
    %v135 = vld [vmem:[#allocation5 + $0x38] sm:$0xff]
    %v136 = vld [vmem:[#allocation5 + $0x40] sm:$0xff]
    %v137 = vld [vmem:[#allocation5 + $0x48] sm:$0xff]
    %v138 = vld [vmem:[#allocation5 + $0x50] sm:$0xff]
    %v139 = vld [vmem:[#allocation5 + $0x58] sm:$0xff]
    %v140 = vld [vmem:[#allocation5 + $0x60] sm:$0xff]
    %v141 = vld [vmem:[#allocation5 + $0x68] sm:$0xff]
    %v142 = vld [vmem:[#allocation5 + $0x70] sm:$0xff]
    %v143 = vld [vmem:[#allocation5 + $0x78] sm:$0xff]
    %v144 = vld [vmem:[%s2] sm:$0x1]
    %v146 = vperm.slane %v144, 0
    %148 = vmatpush.msra.mxu0 %v143
    %149 = vmatpush.msra.mxu0 %v142
    %150 = vmatpush.msra.mxu0 %v141
    %151 = vmatpush.msra.mxu0 %v140
    %152 = vmatpush.msra.mxu0 %v139
    %153 = vmatpush.msra.mxu0 %v138
    %154 = vmatpush.msra.mxu0 %v137
    %155 = vmatpush.msra.mxu0 %v136
    %156 = vmatpush.msra.mxu0 %v135
    %157 = vmatpush.msra.mxu0 %v134
    %158 = vmatpush.msra.mxu0 %v133
    %159 = vmatpush.msra.mxu0 %v132
    %160 = vmatpush.msra.mxu0 %v131
    %161 = vmatpush.msra.mxu0 %v130
    %162 = vmatpush.msra.mxu0 %v129
    %163 = vmatpush.msra.mxu0 %v128
    %164 = vmatmul.f32.gmra.mxu0 %v126
    %v165 = vpop.f32.mrf.mxu0
    %v166 = vadd.f32 %v146, %v165
    %167 = vmatmul.f32.gmra.mxu0 %v127
    %v168 = vpop.f32.mrf.mxu0
    %v169 = vadd.f32 %v146, %v168
    %170 = vdwg.mxu0
    %v171 = vadd.f32 %v47, %v166
    %v172 = vadd.f32 %v48, %v169
    %173 = vst [vmem:[#allocation7] sm:$0xff] %v171
    %174 = vst [vmem:[#allocation7 + $0x8] sm:$0xff] %v172
    // Predicated region
    $region22: #{tpu_custom_call.1} parent=1 // pred_check
      _
    $region23: #{tpu_custom_call.1} parent=1 // pred_check_branch
      %176 = sbr.rel (0) target = $region25
    $region24: #{tpu_custom_call.1} parent=1 // pred_region
      %178 = vsyncadd [#allocation4], 0
      %s179 = sshll.u32 [#allocation7], 4
      %s180 = int_to_ptr.vmem [resolvable:$true] %s179
      %s181 = sshll.u32 %s3, 4
      %s182 = int_to_ptr.hbm [resolvable:$true] %s181
      %187 = dma.vmem_to_hbm [thread:$0]  %s180, 256, %s182, [#allocation4], 128, 128, 8
    $region25: #{tpu_custom_call.1} parent=1 // pred_fallthru
      _
    // Predicated region
    $region26: #{tpu_custom_call.1} parent=1 // pred_check
      _
    $region27: #{tpu_custom_call.1} parent=1 // pred_check_branch
      %189 = sbr.rel (0) target = $region29
    $region28: #{tpu_custom_call.1} parent=1 // pred_region
      %191 = dma.done [#allocation4], 256
    $region29: #{tpu_custom_call.1} parent=1 // pred_fallthru
      _
    %192 = vsyncpa [#allocation3], 1
    %193 = vsyncpa [#allocation6], 1
    %194 = vsyncpa [#allocation4], 1

</llo_original>
